<compile_context>
chip_gen: v5e
topology: v5e:2x2
jax: 0.10.0
libtpu: 0.0.40
codegen_flags: <defaults>
</compile_context>

<pallas_src>
from functools import partial

import numpy as np
import jax
import jax.numpy as jnp
from jax import lax
from jax.experimental import pallas as pl
from jax.experimental.pallas import tpu as pltpu

EMB = 32            # embedding_dim (small demo size; reference default is 128)
NEG_SLOPE = 0.01    # nn.LeakyReLU default slope
NEG_BIG = -1e30     # finite "-inf" for masked logits


# ---------------------------------------------------------------------------
# Parameter slab layout (rows are 8-aligned so every in-kernel slice is a
# sublane-aligned static slice of a single VMEM ref -> one DMA for all weights)
# ---------------------------------------------------------------------------
def _slab_offsets(D):
    def rnd8(x):
        return ((x + 7) // 8) * 8
    offs, cur = {}, 0
    for name, rows in (("w1", 2), ("b1", 1), ("w2", D), ("b2", 1),
                       ("wma", D), ("wself", D), ("bg", 1), ("wp", D)):
        offs[name] = (cur, rows)
        cur = rnd8(cur + rows)
    return offs, cur


def _leaky(x):
    return jnp.maximum(x, NEG_SLOPE * x)


# ---------------------------------------------------------------------------
# Kernel: full get_policy + autoregressive action selection, single program.
# ---------------------------------------------------------------------------
def _agent_kernel(pos_ref, ef_ref, gum_ref, slab_ref, es_ref, ints_ref,
                  policy_ref, act_ref, *, A, T, offs):
    f32 = jnp.float32

    def w(name):
        o, r = offs[name]
        return slab_ref[o:o + r, :]

    # ---- init_node_embedding on the stacked [A+T, 2] positions (one pass).
    pos = pos_ref[...]                                                  # [N, 2]
    h = _leaky(jnp.dot(pos, w("w1"), preferred_element_type=f32) + w("b1"))
    nf = _leaky(jnp.dot(h, w("w2"), preferred_element_type=f32) + w("b2"))  # [N, D]

    # ---- scalar edge gate from the 3 edge channels (scalars read from SMEM).
    ef0 = ef_ref[0 * A:1 * A, :]
    ef1 = ef_ref[1 * A:2 * A, :]
    ef2 = ef_ref[2 * A:3 * A, :]
    alpha = _leaky(es_ref[0] * ef0 + es_ref[1] * ef1 + es_ref[2] * ef2
                   + es_ref[3])                                         # [A, T]

    # ---- GNN layer: message projection pre-folded with the aggregation
    #      weight (wma = wm @ wagg, done on host) -> one stacked matmul each.
    msg = jnp.dot(nf, w("wma"), preferred_element_type=f32)             # [N, D]
    slf = jnp.dot(nf, w("wself"), preferred_element_type=f32)           # [N, D]

    a_nf, t_nf = nf[:A], nf[A:]
    msg_a, msg_t = msg[:A], msg[A:]
    slf_a, slf_t = slf[:A], slf[A:]

    # mean aggregation over the dense bipartite graph (1/T, 1/A as const muls)
    agg_a = jnp.dot(alpha, msg_t, preferred_element_type=f32) * f32(1.0 / T)
    agg_t = lax.dot_general(alpha, msg_a, (((0,), (0,)), ((), ())),
                            preferred_element_type=f32) * f32(1.0 / A)

    bg = w("bg")
    a_out = _leaky(slf_a + agg_a + bg) + a_nf                            # residual
    t_out = _leaky(slf_t + agg_t + bg) + t_nf

    # ---- Bipartite policy: bilinear agent-task score, softmax over tasks.
    a_p = jnp.dot(a_out, w("wp"), preferred_element_type=f32)            # [A, D]
    scores = lax.dot_general(a_p, t_out, (((1,), (1,)), ((), ())),
                             preferred_element_type=f32)                 # [A, T]
    scores = scores - jnp.max(scores, axis=-1, keepdims=True)
    e = jnp.exp(scores)
    policy = e * pl.reciprocal(jnp.sum(e, axis=-1, keepdims=True), approx=True)
    policy_ref[...] = policy

    # ---- autoregressive action selection (Gumbel-max == Categorical sample),
    #      fully in-kernel; ag_order / continuing / prev actions come from SMEM.
    gumbel = gum_ref[...]                                                # [A, T]
    lane_t = lax.broadcasted_iota(jnp.int32, (1, T), 1)
    lane_a = lax.broadcasted_iota(jnp.int32, (1, A), 1)
    row_a = lax.broadcasted_iota(jnp.int32, (A, 1), 0)

    mask = jnp.ones((1, T), f32)              # 1 = task column still available
    actions = jnp.full((1, A), -1, jnp.int32)

    for itr in range(A):                      # A is tiny & static -> unrolled
        agent_idx = ints_ref[itr]
        is_cont = ints_ref[A + agent_idx] != 0
        prev_act = ints_ref[2 * A + agent_idx]

        onehot = (row_a == agent_idx).astype(f32)                        # [A, 1]
        row_p = jnp.sum(policy * onehot, axis=0, keepdims=True)          # [1, T]
        row_g = jnp.sum(gumbel * onehot, axis=0, keepdims=True)          # [1, T]

        avail = row_p * mask
        all_zero = jnp.sum(avail, axis=-1, keepdims=True) <= 0.0         # [1, 1]

        logits = jnp.where(avail > 0.0,
                           jnp.log(jnp.maximum(avail, 1e-30)) + row_g,
                           NEG_BIG)
        mx = jnp.max(logits, axis=-1, keepdims=True)
        sel = jnp.min(jnp.where(logits >= mx, lane_t.astype(f32), f32(T)),
                      axis=-1, keepdims=True).astype(jnp.int32)          # first argmax

        act = jnp.where(all_zero, jnp.int32(-1), sel)
        act = jnp.where(is_cont, prev_act, act)

        actions = jnp.where(lane_a == itr, act, actions)
        mask = mask * (lane_t != act).astype(f32)   # act == -1 leaves mask intact

    act_ref[...] = actions


# ---------------------------------------------------------------------------
# Host-side wrappers
# ---------------------------------------------------------------------------
@partial(jax.jit, static_argnames=("train",))
def _policy_and_actions(slab, edge_sc, agent_pos, task_pos, ef, ints, key, train):
    A, T = agent_pos.shape[0], task_pos.shape[0]
    D = slab.shape[1]
    offs, _ = _slab_offsets(D)

    pos_all = jnp.concatenate([agent_pos, task_pos], axis=0).astype(jnp.float32)
    ef2 = ef.astype(jnp.float32).reshape(3 * A, T)
    gumbel = (jax.random.gumbel(key, (A, T), jnp.float32) if train
              else jnp.zeros((A, T), jnp.float32))

    vmem = pl.BlockSpec(memory_space=pltpu.MemorySpace.VMEM)
    smem = pl.BlockSpec(memory_space=pltpu.MemorySpace.SMEM)

    return pl.pallas_call(
        partial(_agent_kernel, A=A, T=T, offs=offs),
        out_shape=(jax.ShapeDtypeStruct((A, T), jnp.float32),
                   jax.ShapeDtypeStruct((1, A), jnp.int32)),
        in_specs=[vmem, vmem, vmem, vmem, smem, smem],
        out_specs=(vmem, vmem),
    )(pos_all, ef2, gumbel, slab, edge_sc, ints)


def make_params(key, emb=EMB):
    ks = jax.random.split(key, 8)

    def lin(k, fan_in, shape):
        return jax.random.normal(k, shape, jnp.float32) / np.sqrt(fan_in)

    return dict(
        w1=lin(ks[0], 2, (2, emb)), b1=jnp.zeros((emb,), jnp.float32),
        w2=lin(ks[1], emb, (emb, emb)), b2=jnp.zeros((emb,), jnp.float32),
        we=lin(ks[2], 3, (3,)), be=jnp.zeros((1,), jnp.float32),
        wm=lin(ks[3], emb, (emb, emb)),
        wself=lin(ks[4], emb, (emb, emb)),
        wagg=lin(ks[5], emb, (emb, emb)),
        bg=jnp.zeros((emb,), jnp.float32),
        wp=lin(ks[6], emb, (emb, emb)),
    )


def pack_params(params):
    """Pack all D-wide weights into one aligned VMEM slab (+ 4 SMEM scalars).
    Folds wm @ wagg so the kernel needs one message matmul instead of three."""
    D = params["w2"].shape[0]
    offs, rows = _slab_offsets(D)
    parts = dict(
        w1=params["w1"], b1=params["b1"].reshape(1, D),
        w2=params["w2"], b2=params["b2"].reshape(1, D),
        wma=jnp.matmul(params["wm"], params["wagg"]),
        wself=params["wself"], bg=params["bg"].reshape(1, D),
        wp=params["wp"],
    )
    slab = jnp.zeros((rows, D), jnp.float32)
    for name, (o, r) in offs.items():
        slab = slab.at[o:o + r, :].set(parts[name].astype(jnp.float32))
    edge_sc = jnp.concatenate([params["we"].reshape(-1),
                               params["be"].reshape(-1)]).astype(jnp.float32)
    return slab, edge_sc


def get_policy(packed, agent_pos, task_pos, ef):
    slab, edge_sc = packed
    A = agent_pos.shape[0]
    ints = jnp.concatenate([jnp.arange(A, dtype=jnp.int32),
                            jnp.zeros((2 * A,), jnp.int32)])
    policy, _ = _policy_and_actions(slab, edge_sc, agent_pos, task_pos, ef,
                                    ints, jax.random.PRNGKey(0), train=False)
    return policy


def forward(packed, agent_pos, task_pos, ef, ag_order, continuing_ag,
            joint_action_prev, train=True, key=None):
    """Mirrors Agent.forward: one device dispatch computes the policy and the
    full autoregressive (sampled or greedy) joint action in-kernel."""
    slab, edge_sc = packed
    ints = jnp.asarray(np.concatenate([
        np.asarray(ag_order, np.int32),
        np.asarray(continuing_ag, np.int32),
        np.asarray(joint_action_prev, np.int32)]))
    if key is None:
        key = jax.random.PRNGKey(0)
    _, actions = _policy_and_actions(slab, edge_sc, agent_pos, task_pos, ef,
                                     ints, key, train=train)
    return [int(a) for a in np.asarray(actions).reshape(-1)]


if __name__ == "__main__":
    key = jax.random.PRNGKey(0)
    kp, kapos, ktpos, kef, ksample = jax.random.split(key, 5)

    A, T = 4, 8   # n_agents, n_tasks
    params = make_params(kp)
    packed = pack_params(params)

    agent_pos = jax.random.uniform(kapos, (A, 2), jnp.float32)
    task_pos = jax.random.uniform(ktpos, (T, 2), jnp.float32)
    ef = jax.random.uniform(kef, (3, A, T), jnp.float32)

    policy = get_policy(packed, agent_pos, task_pos, ef)
    jax.block_until_ready(policy)
    assert policy.shape == (A, T)
    assert bool(jnp.all(jnp.isfinite(policy)))
    # rows are (approximately, due to approx reciprocal) probability distributions
    assert bool(jnp.allclose(jnp.sum(policy, axis=-1), 1.0, atol=3e-3))

    ag_order = [2, 0, 3, 1]
    continuing_ag = [False, True, False, False]
    joint_action_prev = [0, 3, 0, 0]

    # sampled (train) path
    actions = forward(packed, agent_pos, task_pos, ef, ag_order, continuing_ag,
                      joint_action_prev, train=True, key=ksample)
    assert len(actions) == A
    assert all(-1 <= a < T for a in actions)
    assert actions[ag_order.index(1)] == joint_action_prev[1]   # continuing agent

    # greedy (eval) path vs. a host-side reference of the masking loop
    actions_eval = forward(packed, agent_pos, task_pos, ef, ag_order,
                           continuing_ag, joint_action_prev, train=False)
    pol_np = np.asarray(policy).copy()
    ref_actions = []
    for itr in range(A):
        idx = ag_order[itr]
        if continuing_ag[idx]:
            a = int(joint_action_prev[idx])
        else:
            row = pol_np[idx]
            if np.all(row == 0):
                ref_actions.append(-1)
                continue
            a = int(np.argmax(row))
        ref_actions.append(a)
        pol_np[:, a] = 0.0
    assert actions_eval == ref_actions

    print("KERNEL_OK")
</pallas_src>

<mosaic_0001>
module attributes {stable_mosaic.version = 11 : i64} {
  func.func @_agent_kernel(%arg0: memref<12x2xf32, #tpu.memory_space<vmem>>, %arg1: memref<12x8xf32, #tpu.memory_space<vmem>>, %arg2: memref<4x8xf32, #tpu.memory_space<vmem>>, %arg3: memref<160x32xf32, #tpu.memory_space<vmem>>, %arg4: memref<4xf32, #tpu.memory_space<smem>>, %arg5: memref<12xi32, #tpu.memory_space<smem>>, %arg6: memref<4x8xf32, #tpu.memory_space<vmem>>, %arg7: memref<1x4xi32, #tpu.memory_space<vmem>>) attributes {dimension_semantics = [], scalar_prefetch = 0 : i64, scratch_operands = 0 : i64, tpu.core_type = #tpu.core_type<tc>} {
    %c0 = arith.constant 0 : index
    %c0_0 = arith.constant 0 : index
    %0 = vector.load %arg0[%c0, %c0_0] : memref<12x2xf32, #tpu.memory_space<vmem>>, vector<12x2xf32>
    %c0_1 = arith.constant 0 : index
    %c0_2 = arith.constant 0 : index
    %1 = vector.load %arg3[%c0_1, %c0_2] : memref<160x32xf32, #tpu.memory_space<vmem>>, vector<2x32xf32>
    %cst = arith.constant dense<0.000000e+00> : vector<12x32xf32>
    %2 = tpu.matmul %0, %1, %cst {dimension_numbers = #tpu.dot_dimension_numbers<[1], [0], [0], [1], [0, 0, 1, 1], [], []>} : vector<12x2xf32>, vector<2x32xf32>, vector<12x32xf32> -> vector<12x32xf32>
    %c8 = arith.constant 8 : index
    %c0_3 = arith.constant 0 : index
    %3 = vector.load %arg3[%c8, %c0_3] : memref<160x32xf32, #tpu.memory_space<vmem>>, vector<1x32xf32>
    %4 = vector.broadcast %3 : vector<1x32xf32> to vector<12x32xf32>
    %5 = arith.addf %2, %4 : vector<12x32xf32>
    %cst_4 = arith.constant 0.00999999977 : f32
    %6 = vector.broadcast %cst_4 : f32 to vector<12x32xf32>
    %7 = arith.mulf %6, %5 : vector<12x32xf32>
    %8 = arith.maximumf %5, %7 : vector<12x32xf32>
    %c16 = arith.constant 16 : index
    %c0_5 = arith.constant 0 : index
    %9 = vector.load %arg3[%c16, %c0_5] : memref<160x32xf32, #tpu.memory_space<vmem>>, vector<32x32xf32>
    %cst_6 = arith.constant dense<0.000000e+00> : vector<12x32xf32>
    %10 = tpu.matmul %8, %9, %cst_6 {dimension_numbers = #tpu.dot_dimension_numbers<[1], [0], [0], [1], [0, 0, 1, 1], [], []>} : vector<12x32xf32>, vector<32x32xf32>, vector<12x32xf32> -> vector<12x32xf32>
    %c48 = arith.constant 48 : index
    %c0_7 = arith.constant 0 : index
    %11 = vector.load %arg3[%c48, %c0_7] : memref<160x32xf32, #tpu.memory_space<vmem>>, vector<1x32xf32>
    %12 = vector.broadcast %11 : vector<1x32xf32> to vector<12x32xf32>
    %13 = arith.addf %10, %12 : vector<12x32xf32>
    %cst_8 = arith.constant 0.00999999977 : f32
    %14 = vector.broadcast %cst_8 : f32 to vector<12x32xf32>
    %15 = arith.mulf %14, %13 : vector<12x32xf32>
    %16 = arith.maximumf %13, %15 : vector<12x32xf32>
    %c0_9 = arith.constant 0 : index
    %c0_10 = arith.constant 0 : index
    %17 = vector.load %arg1[%c0_9, %c0_10] : memref<12x8xf32, #tpu.memory_space<vmem>>, vector<4x8xf32>
    %c4 = arith.constant 4 : index
    %c0_11 = arith.constant 0 : index
    %18 = vector.load %arg1[%c4, %c0_11] : memref<12x8xf32, #tpu.memory_space<vmem>>, vector<4x8xf32>
    %c8_12 = arith.constant 8 : index
    %c0_13 = arith.constant 0 : index
    %19 = vector.load %arg1[%c8_12, %c0_13] : memref<12x8xf32, #tpu.memory_space<vmem>>, vector<4x8xf32>
    %c0_14 = arith.constant 0 : index
    %20 = memref.load %arg4[%c0_14] : memref<4xf32, #tpu.memory_space<smem>>
    %21 = vector.broadcast %20 : f32 to vector<4x8xf32>
    %22 = arith.mulf %21, %17 : vector<4x8xf32>
    %c1 = arith.constant 1 : index
    %23 = memref.load %arg4[%c1] : memref<4xf32, #tpu.memory_space<smem>>
    %24 = vector.broadcast %23 : f32 to vector<4x8xf32>
    %25 = arith.mulf %24, %18 : vector<4x8xf32>
    %26 = arith.addf %22, %25 : vector<4x8xf32>
    %c2 = arith.constant 2 : index
    %27 = memref.load %arg4[%c2] : memref<4xf32, #tpu.memory_space<smem>>
    %28 = vector.broadcast %27 : f32 to vector<4x8xf32>
    %29 = arith.mulf %28, %19 : vector<4x8xf32>
    %30 = arith.addf %26, %29 : vector<4x8xf32>
    %c3 = arith.constant 3 : index
    %31 = memref.load %arg4[%c3] : memref<4xf32, #tpu.memory_space<smem>>
    %32 = vector.broadcast %31 : f32 to vector<4x8xf32>
    %33 = arith.addf %30, %32 : vector<4x8xf32>
    %cst_15 = arith.constant 0.00999999977 : f32
    %34 = vector.broadcast %cst_15 : f32 to vector<4x8xf32>
    %35 = arith.mulf %34, %33 : vector<4x8xf32>
    %36 = arith.maximumf %33, %35 : vector<4x8xf32>
    %c56 = arith.constant 56 : index
    %c0_16 = arith.constant 0 : index
    %37 = vector.load %arg3[%c56, %c0_16] : memref<160x32xf32, #tpu.memory_space<vmem>>, vector<32x32xf32>
    %cst_17 = arith.constant dense<0.000000e+00> : vector<12x32xf32>
    %38 = tpu.matmul %16, %37, %cst_17 {dimension_numbers = #tpu.dot_dimension_numbers<[1], [0], [0], [1], [0, 0, 1, 1], [], []>} : vector<12x32xf32>, vector<32x32xf32>, vector<12x32xf32> -> vector<12x32xf32>
    %c88 = arith.constant 88 : index
    %c0_18 = arith.constant 0 : index
    %39 = vector.load %arg3[%c88, %c0_18] : memref<160x32xf32, #tpu.memory_space<vmem>>, vector<32x32xf32>
    %cst_19 = arith.constant dense<0.000000e+00> : vector<12x32xf32>
    %40 = tpu.matmul %16, %39, %cst_19 {dimension_numbers = #tpu.dot_dimension_numbers<[1], [0], [0], [1], [0, 0, 1, 1], [], []>} : vector<12x32xf32>, vector<32x32xf32>, vector<12x32xf32> -> vector<12x32xf32>
    %41 = vector.extract_strided_slice %16 {offsets = [0, 0], sizes = [4, 32], strides = [1, 1]} : vector<12x32xf32> to vector<4x32xf32>
    %42 = vector.extract_strided_slice %16 {offsets = [4, 0], sizes = [8, 32], strides = [1, 1]} : vector<12x32xf32> to vector<8x32xf32>
    %43 = vector.extract_strided_slice %38 {offsets = [0, 0], sizes = [4, 32], strides = [1, 1]} : vector<12x32xf32> to vector<4x32xf32>
    %44 = vector.extract_strided_slice %38 {offsets = [4, 0], sizes = [8, 32], strides = [1, 1]} : vector<12x32xf32> to vector<8x32xf32>
    %45 = vector.extract_strided_slice %40 {offsets = [0, 0], sizes = [4, 32], strides = [1, 1]} : vector<12x32xf32> to vector<4x32xf32>
    %46 = vector.extract_strided_slice %40 {offsets = [4, 0], sizes = [8, 32], strides = [1, 1]} : vector<12x32xf32> to vector<8x32xf32>
    %cst_20 = arith.constant dense<0.000000e+00> : vector<4x32xf32>
    %47 = tpu.matmul %36, %44, %cst_20 {dimension_numbers = #tpu.dot_dimension_numbers<[1], [0], [0], [1], [0, 0, 1, 1], [], []>} : vector<4x8xf32>, vector<8x32xf32>, vector<4x32xf32> -> vector<4x32xf32>
    %cst_21 = arith.constant 1.250000e-01 : f32
    %48 = vector.broadcast %cst_21 : f32 to vector<4x32xf32>
    %49 = arith.mulf %47, %48 : vector<4x32xf32>
    %cst_22 = arith.constant dense<0.000000e+00> : vector<8x32xf32>
    %50 = tpu.matmul %36, %43, %cst_22 {dimension_numbers = #tpu.dot_dimension_numbers<[0], [0], [1], [1], [0, 1, 1, 1], [], []>} : vector<4x8xf32>, vector<4x32xf32>, vector<8x32xf32> -> vector<8x32xf32>
    %cst_23 = arith.constant 2.500000e-01 : f32
    %51 = vector.broadcast %cst_23 : f32 to vector<8x32xf32>
    %52 = arith.mulf %50, %51 : vector<8x32xf32>
    %c120 = arith.constant 120 : index
    %c0_24 = arith.constant 0 : index
    %53 = vector.load %arg3[%c120, %c0_24] : memref<160x32xf32, #tpu.memory_space<vmem>>, vector<1x32xf32>
    %54 = arith.addf %45, %49 : vector<4x32xf32>
    %55 = vector.broadcast %53 : vector<1x32xf32> to vector<4x32xf32>
    %56 = arith.addf %54, %55 : vector<4x32xf32>
    %cst_25 = arith.constant 0.00999999977 : f32
    %57 = vector.broadcast %cst_25 : f32 to vector<4x32xf32>
    %58 = arith.mulf %57, %56 : vector<4x32xf32>
    %59 = arith.maximumf %56, %58 : vector<4x32xf32>
    %60 = arith.addf %59, %41 : vector<4x32xf32>
    %61 = arith.addf %46, %52 : vector<8x32xf32>
    %62 = vector.broadcast %53 : vector<1x32xf32> to vector<8x32xf32>
    %63 = arith.addf %61, %62 : vector<8x32xf32>
    %cst_26 = arith.constant 0.00999999977 : f32
    %64 = vector.broadcast %cst_26 : f32 to vector<8x32xf32>
    %65 = arith.mulf %64, %63 : vector<8x32xf32>
    %66 = arith.maximumf %63, %65 : vector<8x32xf32>
    %67 = arith.addf %66, %42 : vector<8x32xf32>
    %c128 = arith.constant 128 : index
    %c0_27 = arith.constant 0 : index
    %68 = vector.load %arg3[%c128, %c0_27] : memref<160x32xf32, #tpu.memory_space<vmem>>, vector<32x32xf32>
    %cst_28 = arith.constant dense<0.000000e+00> : vector<4x32xf32>
    %69 = tpu.matmul %60, %68, %cst_28 {dimension_numbers = #tpu.dot_dimension_numbers<[1], [0], [0], [1], [0, 0, 1, 1], [], []>} : vector<4x32xf32>, vector<32x32xf32>, vector<4x32xf32> -> vector<4x32xf32>
    %cst_29 = arith.constant dense<0.000000e+00> : vector<4x8xf32>
    %70 = tpu.matmul %69, %67, %cst_29 {dimension_numbers = #tpu.dot_dimension_numbers<[1], [1], [0], [0], [0, 0, 1, 0], [], []>} : vector<4x32xf32>, vector<8x32xf32>, vector<4x8xf32> -> vector<4x8xf32>
    %cst_30 = arith.constant dense<0xFF800000> : vector<4xf32>
    %71 = vector.multi_reduction <maximumf>, %70, %cst_30 [1] : vector<4x8xf32> to vector<4xf32>
    %72 = vector.shape_cast %71 : vector<4xf32> to vector<4x1xf32>
    %73 = vector.broadcast %72 : vector<4x1xf32> to vector<4x8xf32>
    %74 = arith.subf %70, %73 : vector<4x8xf32>
    %75 = math.exp %74 : vector<4x8xf32>
    %cst_31 = arith.constant dense<0.000000e+00> : vector<4xf32>
    %76 = vector.multi_reduction <add>, %75, %cst_31 [1] : vector<4x8xf32> to vector<4xf32>
    %77 = vector.shape_cast %76 : vector<4xf32> to vector<4x1xf32>
    %78 = tpu.reciprocal %77 {approx = true} : vector<4x1xf32> -> vector<4x1xf32>
    %79 = vector.broadcast %78 : vector<4x1xf32> to vector<4x8xf32>
    %80 = arith.mulf %75, %79 : vector<4x8xf32>
    %c0_32 = arith.constant 0 : index
    %c0_33 = arith.constant 0 : index
    %81 = vector.load %arg6[%c0_32, %c0_33] : memref<4x8xf32, #tpu.memory_space<vmem>>, vector<4x8xf32>
    tpu.vector_store %arg6[%c0_32, %c0_33], %80 {strides = array<i32>} : memref<4x8xf32, #tpu.memory_space<vmem>>, vector<4x8xf32>,
    %c0_34 = arith.constant 0 : index
    %c0_35 = arith.constant 0 : index
    %82 = vector.load %arg2[%c0_34, %c0_35] : memref<4x8xf32, #tpu.memory_space<vmem>>, vector<4x8xf32>
    %83 = tpu.iota {dimensions = array<i32: 1>} : vector<1x8xi32>
    %84 = tpu.iota {dimensions = array<i32: 1>} : vector<1x4xi32>
    %85 = tpu.iota {dimensions = array<i32: 0>} : vector<4x1xi32>
    %cst_36 = arith.constant 1.000000e+00 : f32
    %86 = vector.broadcast %cst_36 : f32 to vector<1x8xf32>
    %c-1_i32 = arith.constant -1 : i32
    %87 = vector.broadcast %c-1_i32 : i32 to vector<1x4xi32>
    %c0_37 = arith.constant 0 : index
    %88 = memref.load %arg5[%c0_37] : memref<12xi32, #tpu.memory_space<smem>>
    %c4_i32 = arith.constant 4 : i32
    %89 = arith.addi %c4_i32, %88 : i32
    %90 = arith.index_cast %89 : i32 to index
    %91 = memref.load %arg5[%90] : memref<12xi32, #tpu.memory_space<smem>>
    %c0_i32 = arith.constant 0 : i32
    %92 = arith.cmpi ne, %91, %c0_i32 : i32
    %c8_i32 = arith.constant 8 : i32
    %93 = arith.addi %c8_i32, %88 : i32
    %94 = arith.index_cast %93 : i32 to index
    %95 = memref.load %arg5[%94] : memref<12xi32, #tpu.memory_space<smem>>
    %96 = vector.broadcast %88 : i32 to vector<4x1xi32>
    %97 = arith.cmpi eq, %85, %96 : vector<4x1xi32>
    %98 = arith.extui %97 : vector<4x1xi1> to vector<4x1xi32>
    %99 = arith.sitofp %98 : vector<4x1xi32> to vector<4x1xf32>
    %100 = vector.broadcast %99 : vector<4x1xf32> to vector<4x8xf32>
    %101 = arith.mulf %80, %100 : vector<4x8xf32>
    %cst_38 = arith.constant dense<0.000000e+00> : vector<8xf32>
    %102 = vector.multi_reduction <add>, %101, %cst_38 [0] : vector<4x8xf32> to vector<8xf32>
    %103 = vector.shape_cast %102 : vector<8xf32> to vector<1x8xf32>
    %104 = vector.broadcast %99 : vector<4x1xf32> to vector<4x8xf32>
    %105 = arith.mulf %82, %104 : vector<4x8xf32>
    %cst_39 = arith.constant dense<0.000000e+00> : vector<8xf32>
    %106 = vector.multi_reduction <add>, %105, %cst_39 [0] : vector<4x8xf32> to vector<8xf32>
    %107 = vector.shape_cast %106 : vector<8xf32> to vector<1x8xf32>
    %108 = arith.mulf %103, %86 : vector<1x8xf32>
    %cst_40 = arith.constant dense<0.000000e+00> : vector<1xf32>
    %109 = vector.multi_reduction <add>, %108, %cst_40 [1] : vector<1x8xf32> to vector<1xf32>
    %110 = vector.shape_cast %109 : vector<1xf32> to vector<1x1xf32>
    %cst_41 = arith.constant 0.000000e+00 : f32
    %111 = vector.broadcast %cst_41 : f32 to vector<1x1xf32>
    %112 = arith.cmpf ole, %110, %111 : vector<1x1xf32>
    %cst_42 = arith.constant 0.000000e+00 : f32
    %113 = vector.broadcast %cst_42 : f32 to vector<1x8xf32>
    %114 = arith.cmpf ogt, %108, %113 : vector<1x8xf32>
    %cst_43 = arith.constant 1.000000e-30 : f32
    %115 = vector.broadcast %cst_43 : f32 to vector<1x8xf32>
    %116 = arith.maximumf %108, %115 : vector<1x8xf32>
    %117 = math.log %116 : vector<1x8xf32>
    %118 = arith.addf %117, %107 : vector<1x8xf32>
    %cst_44 = arith.constant -1.000000e+30 : f32
    %119 = vector.broadcast %cst_44 : f32 to vector<1x8xf32>
    %120 = arith.select %114, %118, %119 : vector<1x8xi1>, vector<1x8xf32>
    %cst_45 = arith.constant dense<0xFF800000> : vector<1xf32>
    %121 = vector.multi_reduction <maximumf>, %120, %cst_45 [1] : vector<1x8xf32> to vector<1xf32>
    %122 = vector.shape_cast %121 : vector<1xf32> to vector<1x1xf32>
    %123 = vector.broadcast %122 : vector<1x1xf32> to vector<1x8xf32>
    %124 = arith.cmpf oge, %120, %123 : vector<1x8xf32>
    %125 = arith.sitofp %83 : vector<1x8xi32> to vector<1x8xf32>
    %cst_46 = arith.constant 8.000000e+00 : f32
    %126 = vector.broadcast %cst_46 : f32 to vector<1x8xf32>
    %127 = arith.select %124, %125, %126 : vector<1x8xi1>, vector<1x8xf32>
    %cst_47 = arith.constant dense<0x7F800000> : vector<1xf32>
    %128 = vector.multi_reduction <minimumf>, %127, %cst_47 [1] : vector<1x8xf32> to vector<1xf32>
    %129 = vector.shape_cast %128 : vector<1xf32> to vector<1x1xf32>
    %130 = arith.fptosi %129 : vector<1x1xf32> to vector<1x1xi32>
    %c-1_i32_48 = arith.constant -1 : i32
    %131 = vector.broadcast %c-1_i32_48 : i32 to vector<1x1xi32>
    %132 = arith.select %112, %131, %130 : vector<1x1xi1>, vector<1x1xi32>
    %133 = vector.broadcast %95 : i32 to vector<1x1xi32>
    %134 = arith.select %92, %133, %132 : vector<1x1xi32>
    %c0_i32_49 = arith.constant 0 : i32
    %135 = vector.broadcast %c0_i32_49 : i32 to vector<1x4xi32>
    %136 = arith.cmpi eq, %84, %135 : vector<1x4xi32>
    %137 = vector.shape_cast %134 : vector<1x1xi32> to vector<1x1xi32>
    %138 = vector.broadcast %137 : vector<1x1xi32> to vector<1x4xi32>
    %139 = arith.select %136, %138, %87 : vector<1x4xi1>, vector<1x4xi32>
    %140 = vector.broadcast %134 : vector<1x1xi32> to vector<1x8xi32>
    %141 = arith.cmpi ne, %83, %140 : vector<1x8xi32>
    %142 = arith.extui %141 : vector<1x8xi1> to vector<1x8xi32>
    %143 = arith.sitofp %142 : vector<1x8xi32> to vector<1x8xf32>
    %144 = arith.mulf %86, %143 : vector<1x8xf32>
    %c1_50 = arith.constant 1 : index
    %145 = memref.load %arg5[%c1_50] : memref<12xi32, #tpu.memory_space<smem>>
    %c4_i32_51 = arith.constant 4 : i32
    %146 = arith.addi %c4_i32_51, %145 : i32
    %147 = arith.index_cast %146 : i32 to index
    %148 = memref.load %arg5[%147] : memref<12xi32, #tpu.memory_space<smem>>
    %c0_i32_52 = arith.constant 0 : i32
    %149 = arith.cmpi ne, %148, %c0_i32_52 : i32
    %c8_i32_53 = arith.constant 8 : i32
    %150 = arith.addi %c8_i32_53, %145 : i32
    %151 = arith.index_cast %150 : i32 to index
    %152 = memref.load %arg5[%151] : memref<12xi32, #tpu.memory_space<smem>>
    %153 = vector.broadcast %145 : i32 to vector<4x1xi32>
    %154 = arith.cmpi eq, %85, %153 : vector<4x1xi32>
    %155 = arith.extui %154 : vector<4x1xi1> to vector<4x1xi32>
    %156 = arith.sitofp %155 : vector<4x1xi32> to vector<4x1xf32>
    %157 = vector.broadcast %156 : vector<4x1xf32> to vector<4x8xf32>
    %158 = arith.mulf %80, %157 : vector<4x8xf32>
    %cst_54 = arith.constant dense<0.000000e+00> : vector<8xf32>
    %159 = vector.multi_reduction <add>, %158, %cst_54 [0] : vector<4x8xf32> to vector<8xf32>
    %160 = vector.shape_cast %159 : vector<8xf32> to vector<1x8xf32>
    %161 = vector.broadcast %156 : vector<4x1xf32> to vector<4x8xf32>
    %162 = arith.mulf %82, %161 : vector<4x8xf32>
    %cst_55 = arith.constant dense<0.000000e+00> : vector<8xf32>
    %163 = vector.multi_reduction <add>, %162, %cst_55 [0] : vector<4x8xf32> to vector<8xf32>
    %164 = vector.shape_cast %163 : vector<8xf32> to vector<1x8xf32>
    %165 = arith.mulf %160, %144 : vector<1x8xf32>
    %cst_56 = arith.constant dense<0.000000e+00> : vector<1xf32>
    %166 = vector.multi_reduction <add>, %165, %cst_56 [1] : vector<1x8xf32> to vector<1xf32>
    %167 = vector.shape_cast %166 : vector<1xf32> to vector<1x1xf32>
    %cst_57 = arith.constant 0.000000e+00 : f32
    %168 = vector.broadcast %cst_57 : f32 to vector<1x1xf32>
    %169 = arith.cmpf ole, %167, %168 : vector<1x1xf32>
    %cst_58 = arith.constant 0.000000e+00 : f32
    %170 = vector.broadcast %cst_58 : f32 to vector<1x8xf32>
    %171 = arith.cmpf ogt, %165, %170 : vector<1x8xf32>
    %cst_59 = arith.constant 1.000000e-30 : f32
    %172 = vector.broadcast %cst_59 : f32 to vector<1x8xf32>
    %173 = arith.maximumf %165, %172 : vector<1x8xf32>
    %174 = math.log %173 : vector<1x8xf32>
    %175 = arith.addf %174, %164 : vector<1x8xf32>
    %cst_60 = arith.constant -1.000000e+30 : f32
    %176 = vector.broadcast %cst_60 : f32 to vector<1x8xf32>
    %177 = arith.select %171, %175, %176 : vector<1x8xi1>, vector<1x8xf32>
    %cst_61 = arith.constant dense<0xFF800000> : vector<1xf32>
    %178 = vector.multi_reduction <maximumf>, %177, %cst_61 [1] : vector<1x8xf32> to vector<1xf32>
    %179 = vector.shape_cast %178 : vector<1xf32> to vector<1x1xf32>
    %180 = vector.broadcast %179 : vector<1x1xf32> to vector<1x8xf32>
    %181 = arith.cmpf oge, %177, %180 : vector<1x8xf32>
    %182 = arith.sitofp %83 : vector<1x8xi32> to vector<1x8xf32>
    %cst_62 = arith.constant 8.000000e+00 : f32
    %183 = vector.broadcast %cst_62 : f32 to vector<1x8xf32>
    %184 = arith.select %181, %182, %183 : vector<1x8xi1>, vector<1x8xf32>
    %cst_63 = arith.constant dense<0x7F800000> : vector<1xf32>
    %185 = vector.multi_reduction <minimumf>, %184, %cst_63 [1] : vector<1x8xf32> to vector<1xf32>
    %186 = vector.shape_cast %185 : vector<1xf32> to vector<1x1xf32>
    %187 = arith.fptosi %186 : vector<1x1xf32> to vector<1x1xi32>
    %c-1_i32_64 = arith.constant -1 : i32
    %188 = vector.broadcast %c-1_i32_64 : i32 to vector<1x1xi32>
    %189 = arith.select %169, %188, %187 : vector<1x1xi1>, vector<1x1xi32>
    %190 = vector.broadcast %152 : i32 to vector<1x1xi32>
    %191 = arith.select %149, %190, %189 : vector<1x1xi32>
    %c1_i32 = arith.constant 1 : i32
    %192 = vector.broadcast %c1_i32 : i32 to vector<1x4xi32>
    %193 = arith.cmpi eq, %84, %192 : vector<1x4xi32>
    %194 = vector.shape_cast %191 : vector<1x1xi32> to vector<1x1xi32>
    %195 = vector.broadcast %194 : vector<1x1xi32> to vector<1x4xi32>
    %196 = arith.select %193, %195, %139 : vector<1x4xi1>, vector<1x4xi32>
    %197 = vector.broadcast %191 : vector<1x1xi32> to vector<1x8xi32>
    %198 = arith.cmpi ne, %83, %197 : vector<1x8xi32>
    %199 = arith.extui %198 : vector<1x8xi1> to vector<1x8xi32>
    %200 = arith.sitofp %199 : vector<1x8xi32> to vector<1x8xf32>
    %201 = arith.mulf %144, %200 : vector<1x8xf32>
    %c2_65 = arith.constant 2 : index
    %202 = memref.load %arg5[%c2_65] : memref<12xi32, #tpu.memory_space<smem>>
    %c4_i32_66 = arith.constant 4 : i32
    %203 = arith.addi %c4_i32_66, %202 : i32
    %204 = arith.index_cast %203 : i32 to index
    %205 = memref.load %arg5[%204] : memref<12xi32, #tpu.memory_space<smem>>
    %c0_i32_67 = arith.constant 0 : i32
    %206 = arith.cmpi ne, %205, %c0_i32_67 : i32
    %c8_i32_68 = arith.constant 8 : i32
    %207 = arith.addi %c8_i32_68, %202 : i32
    %208 = arith.index_cast %207 : i32 to index
    %209 = memref.load %arg5[%208] : memref<12xi32, #tpu.memory_space<smem>>
    %210 = vector.broadcast %202 : i32 to vector<4x1xi32>
    %211 = arith.cmpi eq, %85, %210 : vector<4x1xi32>
    %212 = arith.extui %211 : vector<4x1xi1> to vector<4x1xi32>
    %213 = arith.sitofp %212 : vector<4x1xi32> to vector<4x1xf32>
    %214 = vector.broadcast %213 : vector<4x1xf32> to vector<4x8xf32>
    %215 = arith.mulf %80, %214 : vector<4x8xf32>
    %cst_69 = arith.constant dense<0.000000e+00> : vector<8xf32>
    %216 = vector.multi_reduction <add>, %215, %cst_69 [0] : vector<4x8xf32> to vector<8xf32>
    %217 = vector.shape_cast %216 : vector<8xf32> to vector<1x8xf32>
    %218 = vector.broadcast %213 : vector<4x1xf32> to vector<4x8xf32>
    %219 = arith.mulf %82, %218 : vector<4x8xf32>
    %cst_70 = arith.constant dense<0.000000e+00> : vector<8xf32>
    %220 = vector.multi_reduction <add>, %219, %cst_70 [0] : vector<4x8xf32> to vector<8xf32>
    %221 = vector.shape_cast %220 : vector<8xf32> to vector<1x8xf32>
    %222 = arith.mulf %217, %201 : vector<1x8xf32>
    %cst_71 = arith.constant dense<0.000000e+00> : vector<1xf32>
    %223 = vector.multi_reduction <add>, %222, %cst_71 [1] : vector<1x8xf32> to vector<1xf32>
    %224 = vector.shape_cast %223 : vector<1xf32> to vector<1x1xf32>
    %cst_72 = arith.constant 0.000000e+00 : f32
    %225 = vector.broadcast %cst_72 : f32 to vector<1x1xf32>
    %226 = arith.cmpf ole, %224, %225 : vector<1x1xf32>
    %cst_73 = arith.constant 0.000000e+00 : f32
    %227 = vector.broadcast %cst_73 : f32 to vector<1x8xf32>
    %228 = arith.cmpf ogt, %222, %227 : vector<1x8xf32>
    %cst_74 = arith.constant 1.000000e-30 : f32
    %229 = vector.broadcast %cst_74 : f32 to vector<1x8xf32>
    %230 = arith.maximumf %222, %229 : vector<1x8xf32>
    %231 = math.log %230 : vector<1x8xf32>
    %232 = arith.addf %231, %221 : vector<1x8xf32>
    %cst_75 = arith.constant -1.000000e+30 : f32
    %233 = vector.broadcast %cst_75 : f32 to vector<1x8xf32>
    %234 = arith.select %228, %232, %233 : vector<1x8xi1>, vector<1x8xf32>
    %cst_76 = arith.constant dense<0xFF800000> : vector<1xf32>
    %235 = vector.multi_reduction <maximumf>, %234, %cst_76 [1] : vector<1x8xf32> to vector<1xf32>
    %236 = vector.shape_cast %235 : vector<1xf32> to vector<1x1xf32>
    %237 = vector.broadcast %236 : vector<1x1xf32> to vector<1x8xf32>
    %238 = arith.cmpf oge, %234, %237 : vector<1x8xf32>
    %239 = arith.sitofp %83 : vector<1x8xi32> to vector<1x8xf32>
    %cst_77 = arith.constant 8.000000e+00 : f32
    %240 = vector.broadcast %cst_77 : f32 to vector<1x8xf32>
    %241 = arith.select %238, %239, %240 : vector<1x8xi1>, vector<1x8xf32>
    %cst_78 = arith.constant dense<0x7F800000> : vector<1xf32>
    %242 = vector.multi_reduction <minimumf>, %241, %cst_78 [1] : vector<1x8xf32> to vector<1xf32>
    %243 = vector.shape_cast %242 : vector<1xf32> to vector<1x1xf32>
    %244 = arith.fptosi %243 : vector<1x1xf32> to vector<1x1xi32>
    %c-1_i32_79 = arith.constant -1 : i32
    %245 = vector.broadcast %c-1_i32_79 : i32 to vector<1x1xi32>
    %246 = arith.select %226, %245, %244 : vector<1x1xi1>, vector<1x1xi32>
    %247 = vector.broadcast %209 : i32 to vector<1x1xi32>
    %248 = arith.select %206, %247, %246 : vector<1x1xi32>
    %c2_i32 = arith.constant 2 : i32
    %249 = vector.broadcast %c2_i32 : i32 to vector<1x4xi32>
    %250 = arith.cmpi eq, %84, %249 : vector<1x4xi32>
    %251 = vector.shape_cast %248 : vector<1x1xi32> to vector<1x1xi32>
    %252 = vector.broadcast %251 : vector<1x1xi32> to vector<1x4xi32>
    %253 = arith.select %250, %252, %196 : vector<1x4xi1>, vector<1x4xi32>
    %254 = vector.broadcast %248 : vector<1x1xi32> to vector<1x8xi32>
    %255 = arith.cmpi ne, %83, %254 : vector<1x8xi32>
    %256 = arith.extui %255 : vector<1x8xi1> to vector<1x8xi32>
    %257 = arith.sitofp %256 : vector<1x8xi32> to vector<1x8xf32>
    %258 = arith.mulf %201, %257 : vector<1x8xf32>
    %c3_80 = arith.constant 3 : index
    %259 = memref.load %arg5[%c3_80] : memref<12xi32, #tpu.memory_space<smem>>
    %c4_i32_81 = arith.constant 4 : i32
    %260 = arith.addi %c4_i32_81, %259 : i32
    %261 = arith.index_cast %260 : i32 to index
    %262 = memref.load %arg5[%261] : memref<12xi32, #tpu.memory_space<smem>>
    %c0_i32_82 = arith.constant 0 : i32
    %263 = arith.cmpi ne, %262, %c0_i32_82 : i32
    %c8_i32_83 = arith.constant 8 : i32
    %264 = arith.addi %c8_i32_83, %259 : i32
    %265 = arith.index_cast %264 : i32 to index
    %266 = memref.load %arg5[%265] : memref<12xi32, #tpu.memory_space<smem>>
    %267 = vector.broadcast %259 : i32 to vector<4x1xi32>
    %268 = arith.cmpi eq, %85, %267 : vector<4x1xi32>
    %269 = arith.extui %268 : vector<4x1xi1> to vector<4x1xi32>
    %270 = arith.sitofp %269 : vector<4x1xi32> to vector<4x1xf32>
    %271 = vector.broadcast %270 : vector<4x1xf32> to vector<4x8xf32>
    %272 = arith.mulf %80, %271 : vector<4x8xf32>
    %cst_84 = arith.constant dense<0.000000e+00> : vector<8xf32>
    %273 = vector.multi_reduction <add>, %272, %cst_84 [0] : vector<4x8xf32> to vector<8xf32>
    %274 = vector.shape_cast %273 : vector<8xf32> to vector<1x8xf32>
    %275 = vector.broadcast %270 : vector<4x1xf32> to vector<4x8xf32>
    %276 = arith.mulf %82, %275 : vector<4x8xf32>
    %cst_85 = arith.constant dense<0.000000e+00> : vector<8xf32>
    %277 = vector.multi_reduction <add>, %276, %cst_85 [0] : vector<4x8xf32> to vector<8xf32>
    %278 = vector.shape_cast %277 : vector<8xf32> to vector<1x8xf32>
    %279 = arith.mulf %274, %258 : vector<1x8xf32>
    %cst_86 = arith.constant dense<0.000000e+00> : vector<1xf32>
    %280 = vector.multi_reduction <add>, %279, %cst_86 [1] : vector<1x8xf32> to vector<1xf32>
    %281 = vector.shape_cast %280 : vector<1xf32> to vector<1x1xf32>
    %cst_87 = arith.constant 0.000000e+00 : f32
    %282 = vector.broadcast %cst_87 : f32 to vector<1x1xf32>
    %283 = arith.cmpf ole, %281, %282 : vector<1x1xf32>
    %cst_88 = arith.constant 0.000000e+00 : f32
    %284 = vector.broadcast %cst_88 : f32 to vector<1x8xf32>
    %285 = arith.cmpf ogt, %279, %284 : vector<1x8xf32>
    %cst_89 = arith.constant 1.000000e-30 : f32
    %286 = vector.broadcast %cst_89 : f32 to vector<1x8xf32>
    %287 = arith.maximumf %279, %286 : vector<1x8xf32>
    %288 = math.log %287 : vector<1x8xf32>
    %289 = arith.addf %288, %278 : vector<1x8xf32>
    %cst_90 = arith.constant -1.000000e+30 : f32
    %290 = vector.broadcast %cst_90 : f32 to vector<1x8xf32>
    %291 = arith.select %285, %289, %290 : vector<1x8xi1>, vector<1x8xf32>
    %cst_91 = arith.constant dense<0xFF800000> : vector<1xf32>
    %292 = vector.multi_reduction <maximumf>, %291, %cst_91 [1] : vector<1x8xf32> to vector<1xf32>
    %293 = vector.shape_cast %292 : vector<1xf32> to vector<1x1xf32>
    %294 = vector.broadcast %293 : vector<1x1xf32> to vector<1x8xf32>
    %295 = arith.cmpf oge, %291, %294 : vector<1x8xf32>
    %296 = arith.sitofp %83 : vector<1x8xi32> to vector<1x8xf32>
    %cst_92 = arith.constant 8.000000e+00 : f32
    %297 = vector.broadcast %cst_92 : f32 to vector<1x8xf32>
    %298 = arith.select %295, %296, %297 : vector<1x8xi1>, vector<1x8xf32>
    %cst_93 = arith.constant dense<0x7F800000> : vector<1xf32>
    %299 = vector.multi_reduction <minimumf>, %298, %cst_93 [1] : vector<1x8xf32> to vector<1xf32>
    %300 = vector.shape_cast %299 : vector<1xf32> to vector<1x1xf32>
    %301 = arith.fptosi %300 : vector<1x1xf32> to vector<1x1xi32>
    %c-1_i32_94 = arith.constant -1 : i32
    %302 = vector.broadcast %c-1_i32_94 : i32 to vector<1x1xi32>
    %303 = arith.select %283, %302, %301 : vector<1x1xi1>, vector<1x1xi32>
    %304 = vector.broadcast %266 : i32 to vector<1x1xi32>
    %305 = arith.select %263, %304, %303 : vector<1x1xi32>
    %c3_i32 = arith.constant 3 : i32
    %306 = vector.broadcast %c3_i32 : i32 to vector<1x4xi32>
    %307 = arith.cmpi eq, %84, %306 : vector<1x4xi32>
    %308 = vector.shape_cast %305 : vector<1x1xi32> to vector<1x1xi32>
    %309 = vector.broadcast %308 : vector<1x1xi32> to vector<1x4xi32>
    %310 = arith.select %307, %309, %253 : vector<1x4xi1>, vector<1x4xi32>
    %c0_95 = arith.constant 0 : index
    %c0_96 = arith.constant 0 : index
    %311 = vector.load %arg7[%c0_95, %c0_96] : memref<1x4xi32, #tpu.memory_space<vmem>>, vector<1x4xi32>
    tpu.vector_store %arg7[%c0_95, %c0_96], %310 {strides = array<i32>} : memref<1x4xi32, #tpu.memory_space<vmem>>, vector<1x4xi32>,
    return
  }
}

</mosaic_0001>

<llo_original>
// kernel: _policy_and_actions.1
$region0: #{_policy_and_actions.1}
  #allocation0 [shape = 'u32[]', space=smem, size = 0x4, offset = 0x4, fixed_abs, tag = 'smem constant byte address 0x4 - core index']
  #allocation1 [shape = 'u32[72,128]{1,0:T(1,128)}', space=vmem, size = 0x9000, scoped, tag = 'internal scratch']
  %s0 = inlined_call_operand.vmem [shape: f32[12,2], index: 0, kind: input, shape index: {}]
  %s1 = inlined_call_operand.vmem [shape: f32[12,8], index: 1, kind: input, shape index: {}]
  %s2 = inlined_call_operand.vmem [shape: f32[4,8], index: 2, kind: input, shape index: {}]
  %s3 = inlined_call_operand.vmem [shape: f32[160,32], index: 3, kind: input, shape index: {}]
  %s4 = inlined_call_operand.vmem [shape: f32[4], index: 4, kind: input, shape index: {}]
  %s5 = inlined_call_operand.vmem [shape: s32[12], index: 5, kind: input, shape index: {}]
  %s6 = inlined_call_operand.hbm [shape: f32[4,8], index: 6, kind: output, shape index: {0}]
  %s7 = inlined_call_operand.hbm [shape: s32[1,4], index: 7, kind: output, shape index: {1}]
  %8 = xla_tuple %s6, %s7
  %s9 = sld [smem:[#allocation0]]
  $region50: #{_policy_and_actions.1} parent=0
    _
  %s11 = ssub.s32 1, %s9
  %s12 = scalar_select 0, %s11, %s9
  $region1: #{_policy_and_actions.1} parent=0
    #allocation2 [shape = 'u8[512]{0}', space=smem, size = 0x200, scoped, tag = 'input window, operand 4, single buffered']
    #allocation3 [shape = 's32[1]{0}', space=sflag, size = 0x4, scoped, tag = 'scoped memory for _policy_and_actions.1']
    #allocation4 [shape = 's32[1]{0}', space=sflag, size = 0x4, scoped, tag = 'scoped memory for _policy_and_actions.1']
    #allocation5 [shape = 'u8[512]{0}', space=smem, size = 0x200, scoped, tag = 'input window, operand 5, single buffered']
    #allocation6 [shape = 's32[1]{0}', space=sflag, size = 0x4, scoped, tag = 'scoped memory for _policy_and_actions.1']
    #allocation7 [shape = 'u8[2048]{0}', space=vmem, size = 0x800, scoped, tag = 'output window, operand 0, single buffered']
    #allocation8 [shape = 'u8[512]{0}', space=vmem, size = 0x400, scoped, tag = 'output window, operand 1, single buffered']
    #allocation9 [shape = 's32[1]{0}', space=sflag, size = 0x4, scoped, tag = 'scoped memory for _policy_and_actions.1']
    %13 = vsyncpa [#allocation4], 0
    %14 = vsyncpa [#allocation6], 0
    %15 = vsyncpa [#allocation3], 0
    %16 = vsyncpa [#allocation9], 0
    // Predicated region
    $region2: #{_policy_and_actions.1} parent=1 // pred_check
      _
    $region3: #{_policy_and_actions.1} parent=1 // pred_check_branch
      %18 = sbr.rel (0) target = $region5
    $region4: #{_policy_and_actions.1} parent=1 // pred_region
      _
    $region5: #{_policy_and_actions.1} parent=1 // pred_fallthru
      _
    // Predicated region
    $region6: #{_policy_and_actions.1} parent=1 // pred_check
      _
    $region7: #{_policy_and_actions.1} parent=1 // pred_check_branch
      %20 = sbr.rel (0) target = $region9
    $region8: #{_policy_and_actions.1} parent=1 // pred_region
      _
    $region9: #{_policy_and_actions.1} parent=1 // pred_fallthru
      _
    // Predicated region
    $region10: #{_policy_and_actions.1} parent=1 // pred_check
      _
    $region11: #{_policy_and_actions.1} parent=1 // pred_check_branch
      %22 = sbr.rel (0) target = $region13
    $region12: #{_policy_and_actions.1} parent=1 // pred_region
      _
    $region13: #{_policy_and_actions.1} parent=1 // pred_fallthru
      _
    // Predicated region
    $region14: #{_policy_and_actions.1} parent=1 // pred_check
      _
    $region15: #{_policy_and_actions.1} parent=1 // pred_check_branch
      %24 = sbr.rel (0) target = $region17
    $region16: #{_policy_and_actions.1} parent=1 // pred_region
      _
    $region17: #{_policy_and_actions.1} parent=1 // pred_fallthru
      _
    // Predicated region
    $region18: #{_policy_and_actions.1} parent=1 // pred_check
      _
    $region19: #{_policy_and_actions.1} parent=1 // pred_check_branch
      %26 = sbr.rel (0) target = $region21
    $region20: #{_policy_and_actions.1} parent=1 // pred_region
      %28 = vsyncadd [#allocation4], 0
      %s30 = sshll.u32 %s4, 4
      %s31 = int_to_ptr.vmem [resolvable:$true] %s30
      %33 = dma.vmem_to_smem %s31, 16, [#allocation2], [#allocation4]
    $region21: #{_policy_and_actions.1} parent=1 // pred_fallthru
      _
    // Predicated region
    $region22: #{_policy_and_actions.1} parent=1 // pred_check
      _
    $region23: #{_policy_and_actions.1} parent=1 // pred_check_branch
      %35 = sbr.rel (0) target = $region25
    $region24: #{_policy_and_actions.1} parent=1 // pred_region
      %37 = vsyncadd [#allocation6], 0
      %s39 = sshll.u32 %s5, 4
      %s40 = int_to_ptr.vmem [resolvable:$true] %s39
      %42 = dma.vmem_to_smem %s40, 16, [#allocation5], [#allocation6]
    $region25: #{_policy_and_actions.1} parent=1 // pred_fallthru
      _
    // Predicated region
    $region26: #{_policy_and_actions.1} parent=1 // pred_check
      _
    $region27: #{_policy_and_actions.1} parent=1 // pred_check_branch
      %44 = sbr.rel (0) target = $region29
    $region28: #{_policy_and_actions.1} parent=1 // pred_region
      %46 = dma.done [#allocation4], 16
    $region29: #{_policy_and_actions.1} parent=1 // pred_fallthru
      _
    // Predicated region
    $region30: #{_policy_and_actions.1} parent=1 // pred_check
      _
    $region31: #{_policy_and_actions.1} parent=1 // pred_check_branch
      %48 = sbr.rel (0) target = $region33
    $region32: #{_policy_and_actions.1} parent=1 // pred_region
      %50 = dma.done [#allocation6], 16
    $region33: #{_policy_and_actions.1} parent=1 // pred_fallthru
      _
    %51 = sfence
    %v52 = vld [vmem:[%s0] sm:$0xff]
    %v53 = vld [vmem:[%s0 + $0x8] sm:$0xf]
    %v54 = vld [vmem:[%s3] sm:$0x3]
    %v55 = vld [vmem:[%s3 + $0x8] sm:$0x1]
    %v56 = vperm.slane %v55, 0
    %vm57 = vcmask 15360
    %v59 = vsel %vm57, %v52, 0
    %v62 = vsel %vm57, %v53, 0
    %vm64 = vcmask 1041408
    %v66 = vsel %vm64, %v54, 0
    %68 = vmatpush.msra.mxu0 0.0
    %69 = vmatpush.msra.mxu0 0.0
    %70 = vmatpush.msra.mxu0 0.0
    %71 = vmatpush.msra.mxu0 0.0
    %72 = vmatpush.msra.mxu0 0.0
    %73 = vmatpush.msra.mxu0 0.0
    %74 = vmatpush.msra.mxu0 0.0
    %75 = vmatpush.msra.mxu0 0.0
    %76 = vmatpush.msra.mxu0 0.0
    %77 = vmatpush.msra.mxu0 0.0
    %78 = vmatpush.msra.mxu0 0.0
    %79 = vmatpush.msra.mxu0 0.0
    %80 = vmatpush.msra.mxu0 0.0
    %81 = vmatpush.msra.mxu0 0.0
    %82 = vmatpush.msra.mxu0 0.0
    %83 = vmatpush.msra.mxu0 %v66
    %84 = vmatmul.f32.gmra.mxu0 %v59
    %v85 = vpop.f32.mrf.mxu0
    %v86 = vadd.f32 %v56, %v85
    %87 = vmatmul.f32.gmra.mxu0 %v62
    %v88 = vpop.f32.mrf.mxu0
    %v89 = vadd.f32 %v56, %v88
    %90 = vdwg.mxu0
    %v91 = vmul.f32 %v86, 0.01
    %v92 = vmul.f32 %v89, 0.01
    %v93 = vmax.f32 %v86, %v91
    %v94 = vmax.f32 %v89, %v92
    %v95 = vld [vmem:[%s3 + $0x10] sm:$0xff]
    %v96 = vld [vmem:[%s3 + $0x18] sm:$0xff]
    %v97 = vld [vmem:[%s3 + $0x20] sm:$0xff]
    %v98 = vld [vmem:[%s3 + $0x28] sm:$0xff]
    %v99 = vld [vmem:[%s3 + $0x30] sm:$0x1]
    %v100 = vperm.slane %v99, 0
    %vm101 = vcmask 261120
    %v103 = vsel %vm101, %v93, 0
    %v106 = vsel %vm101, %v94, 0
    %108 = vmatpush.msra.mxu0 0.0
    %109 = vmatpush.msra.mxu0 0.0
    %110 = vmatpush.msra.mxu0 0.0
    %111 = vmatpush.msra.mxu0 0.0
    %112 = vmatpush.msra.mxu0 0.0
    %113 = vmatpush.msra.mxu0 0.0
    %114 = vmatpush.msra.mxu0 0.0
    %115 = vmatpush.msra.mxu0 0.0
    %116 = vmatpush.msra.mxu0 0.0
    %117 = vmatpush.msra.mxu0 0.0
    %118 = vmatpush.msra.mxu0 0.0
    %119 = vmatpush.msra.mxu0 0.0
    %120 = vmatpush.msra.mxu0 %v98
    %121 = vmatpush.msra.mxu0 %v97
    %122 = vmatpush.msra.mxu0 %v96
    %123 = vmatpush.msra.mxu0 %v95
    %124 = vmatmul.f32.gmra.mxu0 %v103
    %v125 = vpop.f32.mrf.mxu0
    %v126 = vadd.f32 %v100, %v125
    %127 = vmatmul.f32.gmra.mxu0 %v106
    %v128 = vpop.f32.mrf.mxu0
    %v129 = vadd.f32 %v100, %v128
    %130 = vdwg.mxu0
    %v131 = vmul.f32 %v126, 0.01
    %v132 = vmul.f32 %v129, 0.01
    %v133 = vmax.f32 %v126, %v131
    %v134 = vmax.f32 %v129, %v132
    %v135 = vld [vmem:[%s1] sm:$0xf]
    %v136 = vld [vmem:[%s1 + $0x4] sm:$0xf]
    %v137 = vld [vmem:[%s1 + $0x8] sm:$0xf]
    %s138 = sld [smem:[#allocation2]]
    %v139 = vstv %s138
    %v140 = vmul.f32 %v139, %v135
    %s141 = sld [smem:[#allocation2 + $0x1]]
    %v142 = vstv %s141
    %v143 = vmul.f32 %v142, %v136
    %v144 = vadd.f32 %v140, %v143
    %s145 = sld [smem:[#allocation2 + $0x2]]
    %v146 = vstv %s145
    %v147 = vmul.f32 %v146, %v137
    %v148 = vadd.f32 %v144, %v147
    %s149 = sld [smem:[#allocation2 + $0x3]]
    %v150 = vstv %s149
    %v151 = vadd.f32 %v148, %v150
    %v152 = vmul.f32 %v151, 0.01
    %v153 = vmax.f32 %v151, %v152
    %v154 = vld [vmem:[%s3 + $0x38] sm:$0xff]
    %v155 = vld [vmem:[%s3 + $0x40] sm:$0xff]
    %v156 = vld [vmem:[%s3 + $0x48] sm:$0xff]
    %v157 = vld [vmem:[%s3 + $0x50] sm:$0xff]
    %v159 = vsel %vm101, %v133, 0
    %v162 = vsel %vm101, %v134, 0
    %164 = vmatpush.msra.mxu0 0.0
    %165 = vmatpush.msra.mxu0 0.0
    %166 = vmatpush.msra.mxu0 0.0
    %167 = vmatpush.msra.mxu0 0.0
    %168 = vmatpush.msra.mxu0 0.0
    %169 = vmatpush.msra.mxu0 0.0
    %170 = vmatpush.msra.mxu0 0.0
    %171 = vmatpush.msra.mxu0 0.0
    %172 = vmatpush.msra.mxu0 0.0
    %173 = vmatpush.msra.mxu0 0.0
    %174 = vmatpush.msra.mxu0 0.0
    %175 = vmatpush.msra.mxu0 0.0
    %176 = vmatpush.msra.mxu0 %v157
    %177 = vmatpush.msra.mxu0 %v156
    %178 = vmatpush.msra.mxu0 %v155
    %179 = vmatpush.msra.mxu0 %v154
    %180 = vmatmul.f32.gmra.mxu0 %v159
    %v181 = vpop.f32.mrf.mxu0
    %v182 = vadd.f32 0.0, %v181
    %183 = vmatmul.f32.gmra.mxu0 %v162
    %v184 = vpop.f32.mrf.mxu0
    %v185 = vadd.f32 0.0, %v184
    %186 = vdwg.mxu0
    %v187 = vld [vmem:[%s3 + $0x58] sm:$0xff]
    %v188 = vld [vmem:[%s3 + $0x60] sm:$0xff]
    %v189 = vld [vmem:[%s3 + $0x68] sm:$0xff]
    %v190 = vld [vmem:[%s3 + $0x70] sm:$0xff]
    %191 = vmatpush.msra.mxu0 0.0
    %192 = vmatpush.msra.mxu0 0.0
    %193 = vmatpush.msra.mxu0 0.0
    %194 = vmatpush.msra.mxu0 0.0
    %195 = vmatpush.msra.mxu0 0.0
    %196 = vmatpush.msra.mxu0 0.0
    %197 = vmatpush.msra.mxu0 0.0
    %198 = vmatpush.msra.mxu0 0.0
    %199 = vmatpush.msra.mxu0 0.0
    %200 = vmatpush.msra.mxu0 0.0
    %201 = vmatpush.msra.mxu0 0.0
    %202 = vmatpush.msra.mxu0 0.0
    %203 = vmatpush.msra.mxu0 %v190
    %204 = vmatpush.msra.mxu0 %v189
    %205 = vmatpush.msra.mxu0 %v188
    %206 = vmatpush.msra.mxu0 %v187
    %207 = vmatmul.f32.gmra.mxu0 %v159
    %v208 = vpop.f32.mrf.mxu0
    %v209 = vadd.f32 0.0, %v208
    %210 = vmatmul.f32.gmra.mxu0 %v162
    %v211 = vpop.f32.mrf.mxu0
    %v212 = vadd.f32 0.0, %v211
    %213 = vdwg.mxu0
    %vm216 = vcmask 1043456
    %v217 = vrot.slane %v182, 4
    %v218 = vrot.slane %v185, 4
    %v219 = vsel %vm216, %v217, %v218
    %vm221 = vcmask 64512
    %v223 = vsel %vm221, %v153, 0
    %225 = vmatpush.msra.mxu0 0.0
    %226 = vmatpush.msra.mxu0 0.0
    %227 = vmatpush.msra.mxu0 0.0
    %228 = vmatpush.msra.mxu0 0.0
    %229 = vmatpush.msra.mxu0 0.0
    %230 = vmatpush.msra.mxu0 0.0
    %231 = vmatpush.msra.mxu0 0.0
    %232 = vmatpush.msra.mxu0 0.0
    %233 = vmatpush.msra.mxu0 0.0
    %234 = vmatpush.msra.mxu0 0.0
    %235 = vmatpush.msra.mxu0 0.0
    %236 = vmatpush.msra.mxu0 0.0
    %237 = vmatpush.msra.mxu0 0.0
    %238 = vmatpush.msra.mxu0 0.0
    %239 = vmatpush.msra.mxu0 0.0
    %240 = vmatpush.msra.mxu0 %v219
    %241 = vmatmul.f32.gmra.mxu0 %v223
    %v242 = vpop.f32.mrf.mxu0
    %v243 = vadd.f32 0.0, %v242
    %244 = vdwg.mxu0
    %v245 = vmul.f32 %v243, 0.125
    %246 = vxpose.xlu0.b32.start [1/16] %v153, 128
    %247 = vxpose.xlu0.b32.cont [2/16] 0.0, 128
    %248 = vxpose.xlu0.b32.cont [3/16] 0.0, 128
    %249 = vxpose.xlu0.b32.cont [4/16] 0.0, 128
    %250 = vxpose.xlu0.b32.cont [5/16] 0.0, 128
    %251 = vxpose.xlu0.b32.cont [6/16] 0.0, 128
    %252 = vxpose.xlu0.b32.cont [7/16] 0.0, 128
    %253 = vxpose.xlu0.b32.cont [8/16] 0.0, 128
    %254 = vxpose.xlu0.b32.cont [9/16] 0.0, 128
    %255 = vxpose.xlu0.b32.cont [10/16] 0.0, 128
    %256 = vxpose.xlu0.b32.cont [11/16] 0.0, 128
    %257 = vxpose.xlu0.b32.cont [12/16] 0.0, 128
    %258 = vxpose.xlu0.b32.cont [13/16] 0.0, 128
    %259 = vxpose.xlu0.b32.cont [14/16] 0.0, 128
    %260 = vxpose.xlu0.b32.cont [15/16] 0.0, 128
    %261 = vxpose.xlu0.b32.end [16/16] 0.0, 128
    %v262 = vpop.trf.xlu0
    %v263 = vpop.trf.xlu0
    %v264 = vpop.trf.xlu0
    %v265 = vpop.trf.xlu0
    %v266 = vpop.trf.xlu0
    %v267 = vpop.trf.xlu0
    %v268 = vpop.trf.xlu0
    %v269 = vpop.trf.xlu0
    %v270 = vpop.trf.xlu0
    %v271 = vpop.trf.xlu0
    %v272 = vpop.trf.xlu0
    %v273 = vpop.trf.xlu0
    %v274 = vpop.trf.xlu0
    %v275 = vpop.trf.xlu0
    %v276 = vpop.trf.xlu0
    %v277 = vpop.trf.xlu0
    %vm278 = vcmask 31744
    %v280 = vsel %vm278, %v262, 0
    %v282 = vsel %vm216, %v182, 0
    %284 = vmatpush.msra.mxu0 0.0
    %285 = vmatpush.msra.mxu0 0.0
    %286 = vmatpush.msra.mxu0 0.0
    %287 = vmatpush.msra.mxu0 0.0
    %288 = vmatpush.msra.mxu0 0.0
    %289 = vmatpush.msra.mxu0 0.0
    %290 = vmatpush.msra.mxu0 0.0
    %291 = vmatpush.msra.mxu0 0.0
    %292 = vmatpush.msra.mxu0 0.0
    %293 = vmatpush.msra.mxu0 0.0
    %294 = vmatpush.msra.mxu0 0.0
    %295 = vmatpush.msra.mxu0 0.0
    %296 = vmatpush.msra.mxu0 0.0
    %297 = vmatpush.msra.mxu0 0.0
    %298 = vmatpush.msra.mxu0 0.0
    %299 = vmatpush.msra.mxu0 %v282
    %300 = vmatmul.f32.gmra.mxu0 %v280
    %v301 = vpop.f32.mrf.mxu0
    %v302 = vadd.f32 0.0, %v301
    %303 = vdwg.mxu0
    %v304 = vmul.f32 %v302, 0.25
    %v305 = vld [vmem:[%s3 + $0x78] sm:$0x1]
    %v306 = vadd.f32 %v209, %v245
    %v307 = vperm.slane %v305, 0
    %v308 = vadd.f32 %v306, %v307
    %v309 = vmul.f32 %v308, 0.01
    %v310 = vmax.f32 %v308, %v309
    %v311 = vadd.f32 %v310, %v133
    %v313 = vrot.slane %v304, 4
    %v315 = vadd.f32 %v209, %v313
    %v316 = vadd.f32 %v212, %v313
    %v317 = vadd.f32 %v315, %v307
    %v318 = vadd.f32 %v316, %v307
    %v319 = vmul.f32 %v317, 0.01
    %v320 = vmul.f32 %v318, 0.01
    %v321 = vmax.f32 %v317, %v319
    %v322 = vmax.f32 %v318, %v320
    %v323 = vadd.f32 %v321, %v133
    %v324 = vadd.f32 %v322, %v134
    %v325 = vld [vmem:[%s3 + $0x80] sm:$0xff]
    %v326 = vld [vmem:[%s3 + $0x88] sm:$0xff]
    %v327 = vld [vmem:[%s3 + $0x90] sm:$0xff]
    %v328 = vld [vmem:[%s3 + $0x98] sm:$0xff]
    %v330 = vsel %vm101, %v311, 0
    %332 = vmatpush.msra.mxu0 0.0
    %333 = vmatpush.msra.mxu0 0.0
    %334 = vmatpush.msra.mxu0 0.0
    %335 = vmatpush.msra.mxu0 0.0
    %336 = vmatpush.msra.mxu0 0.0
    %337 = vmatpush.msra.mxu0 0.0
    %338 = vmatpush.msra.mxu0 0.0
    %339 = vmatpush.msra.mxu0 0.0
    %340 = vmatpush.msra.mxu0 0.0
    %341 = vmatpush.msra.mxu0 0.0
    %342 = vmatpush.msra.mxu0 0.0
    %343 = vmatpush.msra.mxu0 0.0
    %344 = vmatpush.msra.mxu0 %v328
    %345 = vmatpush.msra.mxu0 %v327
    %346 = vmatpush.msra.mxu0 %v326
    %347 = vmatpush.msra.mxu0 %v325
    %348 = vmatmul.f32.gmra.mxu0 %v330
    %v349 = vpop.f32.mrf.mxu0
    %v350 = vadd.f32 0.0, %v349
    %351 = vdwg.mxu0
    %v354 = vrot.slane %v323, 4
    %v355 = vrot.slane %v324, 4
    %v356 = vsel %vm216, %v354, %v355
    %v358 = vsel %vm101, %v350, 0
    %v360 = vsel %vm101, %v356, 0
    %362 = vmatpush.xpose.msra.mxu0 0.0
    %363 = vmatpush.xpose.msra.mxu0 0.0
    %364 = vmatpush.xpose.msra.mxu0 0.0
    %365 = vmatpush.xpose.msra.mxu0 0.0
    %366 = vmatpush.xpose.msra.mxu0 0.0
    %367 = vmatpush.xpose.msra.mxu0 0.0
    %368 = vmatpush.xpose.msra.mxu0 0.0
    %369 = vmatpush.xpose.msra.mxu0 0.0
    %370 = vmatpush.xpose.msra.mxu0 0.0
    %371 = vmatpush.xpose.msra.mxu0 0.0
    %372 = vmatpush.xpose.msra.mxu0 0.0
    %373 = vmatpush.xpose.msra.mxu0 0.0
    %374 = vmatpush.xpose.msra.mxu0 0.0
    %375 = vmatpush.xpose.msra.mxu0 0.0
    %376 = vmatpush.xpose.msra.mxu0 0.0
    %377 = vmatpush.xpose.msra.mxu0 %v360
    %378 = vmatmul.f32.gmra.mxu0 %v358
    %v379 = vpop.f32.mrf.mxu0
    %v380 = vadd.f32 0.0, %v379
    %381 = vdwg.mxu0
    %vm382 = vcmask 60416
    %v383 = vsel %vm382, %v380, -inf
    %384 = vmax.xlane.f32.xlu0 %v383
    %v385 = vpop.xlane.xlu0 %384
    %v386 = vsub.f32 %v380, %v385
    %v387 = vmul.f32 %v386, 1.442695
    %v388 = vpow.pop %v387
    %v389 = vsel %vm382, %v388, 0.0
    %390 = vadd.xlane.f32.xlu0 %v389
    %v391 = vpop.xlane.xlu0 %390
    %v392 = vrcp.pop %v391
    %v393 = vmul.f32 %v388, %v392
    %394 = vst.msk [vmem:[#allocation7] sm:$0xf] %vm382, %v393
    %v395 = vld [vmem:[%s2] sm:$0xf]
    %v396 = vlaneseq
    %v397 = vand.u32 %v396, 127
    %v398 = vlaneseq
    %v399 = vshrl.u32 %v398, 7
    %s400 = sld [smem:[#allocation5]]
    %s401 = sadd.s32 %s400, 4
    %s402 = sld [smem:[#allocation5 + %s401]]
    %p403 = scmp.ne.s32.totalorder %s402, 0
    %s404 = sadd.s32 %s400, 8
    %s405 = sld [smem:[#allocation5 + %s404]]
    %v406 = vstv %s400
    %vm407 = vcmp.eq.s32.totalorder %v399, %v406
    %v408 = vsel %vm407, 1, 0
    %v409 = vcvt.s32.f32 %v408
    %v410 = vmul.f32 %v393, %v409
    %v411 = vsel %vm382, %v410, 0.0
    %v412 = vrot.slane %v411, 4
    %v413 = vadd.f32 %v411, %v412
    %v414 = vrot.slane %v413, 2
    %v415 = vadd.f32 %v413, %v414
    %v416 = vrot.slane %v415, 1
    %v417 = vadd.f32 %v415, %v416
    %v418 = vmul.f32 %v395, %v409
    %v419 = vsel %vm382, %v418, 0.0
    %v420 = vrot.slane %v419, 4
    %v421 = vadd.f32 %v419, %v420
    %v422 = vrot.slane %v421, 2
    %v423 = vadd.f32 %v421, %v422
    %v424 = vrot.slane %v423, 1
    %v425 = vadd.f32 %v423, %v424
    %v426 = vsel %vm221, %v417, 0.0
    %427 = vadd.xlane.f32.xlu0 %v426
    %v428 = vpop.xlane.xlu0 %427
    %vm429 = vcmp.le.f32.partialorder %v428, 0.0
    %vm430 = vcmp.gt.f32.partialorder %v417, 0.0
    %v431 = vmax.f32 %v417, 1e-30
    %v432 = vlog2.pop %v431
    %v433 = vmul.f32 %v432, 0.6931472
    %v434 = vadd.f32 %v433, %v425
    %v435 = vsel %vm430, %v434, -1e+30
    %v436 = vsel %vm221, %v435, -inf
    %437 = vmax.xlane.f32.xlu0 %v436
    %v438 = vpop.xlane.xlu0 %437
    %vm439 = vcmp.ge.f32.partialorder %v435, %v438
    %v440 = vcvt.s32.f32 %v397
    %v441 = vsel %vm439, %v440, 8.0
    %v442 = vsel %vm221, %v441, inf
    %443 = vmin.xlane.f32.xlu0 %v442
    %v444 = vpop.xlane.xlu0 %443
    %v445 = vcvt.f32.s32.to.zero.pseudo %v444
    %v446 = vsel %vm429, 4294967295, %v445
    %v447 = vstv %s405
    %s448 = scalar_select %p403, 1, 0
    %v449 = vstv %s448
    %vm450 = vcmp.eq.s32.totalorder %v449, 1
    %v451 = vsel %vm450, %v447, %v446
    %vm452 = vcmp.eq.s32.totalorder %v397, 0
    %v453 = vsel %vm452, %v451, 4294967295
    %vm454 = vcmp.ne.s32.totalorder %v397, %v451
    %v455 = vsel %vm454, 1, 0
    %v456 = vcvt.s32.f32 %v455
    %s457 = sld [smem:[#allocation5 + $0x1]]
    %s458 = sadd.s32 %s457, 4
    %s459 = sld [smem:[#allocation5 + %s458]]
    %p460 = scmp.ne.s32.totalorder %s459, 0
    %s461 = sadd.s32 %s457, 8
    %s462 = sld [smem:[#allocation5 + %s461]]
    %v463 = vstv %s457
    %vm464 = vcmp.eq.s32.totalorder %v399, %v463
    %v465 = vsel %vm464, 1, 0
    %v466 = vcvt.s32.f32 %v465
    %v467 = vmul.f32 %v393, %v466
    %v468 = vsel %vm382, %v467, 0.0
    %v469 = vrot.slane %v468, 4
    %v470 = vadd.f32 %v468, %v469
    %v471 = vrot.slane %v470, 2
    %v472 = vadd.f32 %v470, %v471
    %v473 = vrot.slane %v472, 1
    %v474 = vadd.f32 %v472, %v473
    %v475 = vmul.f32 %v395, %v466
    %v476 = vsel %vm382, %v475, 0.0
    %v477 = vrot.slane %v476, 4
    %v478 = vadd.f32 %v476, %v477
    %v479 = vrot.slane %v478, 2
    %v480 = vadd.f32 %v478, %v479
    %v481 = vrot.slane %v480, 1
    %v482 = vadd.f32 %v480, %v481
    %v483 = vmul.f32 %v474, %v456
    %v484 = vsel %vm221, %v483, 0.0
    %485 = vadd.xlane.f32.xlu0 %v484
    %v486 = vpop.xlane.xlu0 %485
    %vm487 = vcmp.le.f32.partialorder %v486, 0.0
    %vm488 = vcmp.gt.f32.partialorder %v483, 0.0
    %v489 = vmax.f32 %v483, 1e-30
    %v490 = vlog2.pop %v489
    %v491 = vmul.f32 %v490, 0.6931472
    %v492 = vadd.f32 %v491, %v482
    %v493 = vsel %vm488, %v492, -1e+30
    %v494 = vsel %vm221, %v493, -inf
    %495 = vmax.xlane.f32.xlu0 %v494
    %v496 = vpop.xlane.xlu0 %495
    %vm497 = vcmp.ge.f32.partialorder %v493, %v496
    %v498 = vsel %vm497, %v440, 8.0
    %v499 = vsel %vm221, %v498, inf
    %500 = vmin.xlane.f32.xlu0 %v499
    %v501 = vpop.xlane.xlu0 %500
    %v502 = vcvt.f32.s32.to.zero.pseudo %v501
    %v503 = vsel %vm487, 4294967295, %v502
    %v504 = vstv %s462
    %s505 = scalar_select %p460, 1, 0
    %v506 = vstv %s505
    %vm507 = vcmp.eq.s32.totalorder %v506, 1
    %v508 = vsel %vm507, %v504, %v503
    %vm509 = vcmp.eq.s32.totalorder %v397, 1
    %v510 = vsel %vm509, %v508, %v453
    %vm511 = vcmp.ne.s32.totalorder %v397, %v508
    %v512 = vsel %vm511, 1, 0
    %v513 = vcvt.s32.f32 %v512
    %v514 = vmul.f32 %v456, %v513
    %s515 = sld [smem:[#allocation5 + $0x2]]
    %s516 = sadd.s32 %s515, 4
    %s517 = sld [smem:[#allocation5 + %s516]]
    %p518 = scmp.ne.s32.totalorder %s517, 0
    %s519 = sadd.s32 %s515, 8
    %s520 = sld [smem:[#allocation5 + %s519]]
    %v521 = vstv %s515
    %vm522 = vcmp.eq.s32.totalorder %v399, %v521
    %v523 = vsel %vm522, 1, 0
    %v524 = vcvt.s32.f32 %v523
    %v525 = vmul.f32 %v393, %v524
    %v526 = vsel %vm382, %v525, 0.0
    %v527 = vrot.slane %v526, 4
    %v528 = vadd.f32 %v526, %v527
    %v529 = vrot.slane %v528, 2
    %v530 = vadd.f32 %v528, %v529
    %v531 = vrot.slane %v530, 1
    %v532 = vadd.f32 %v530, %v531
    %v533 = vmul.f32 %v395, %v524
    %v534 = vsel %vm382, %v533, 0.0
    %v535 = vrot.slane %v534, 4
    %v536 = vadd.f32 %v534, %v535
    %v537 = vrot.slane %v536, 2
    %v538 = vadd.f32 %v536, %v537
    %v539 = vrot.slane %v538, 1
    %v540 = vadd.f32 %v538, %v539
    %v541 = vmul.f32 %v532, %v514
    %v542 = vsel %vm221, %v541, 0.0
    %543 = vadd.xlane.f32.xlu0 %v542
    %v544 = vpop.xlane.xlu0 %543
    %vm545 = vcmp.le.f32.partialorder %v544, 0.0
    %vm546 = vcmp.gt.f32.partialorder %v541, 0.0
    %v547 = vmax.f32 %v541, 1e-30
    %v548 = vlog2.pop %v547
    %v549 = vmul.f32 %v548, 0.6931472
    %v550 = vadd.f32 %v549, %v540
    %v551 = vsel %vm546, %v550, -1e+30
    %v552 = vsel %vm221, %v551, -inf
    %553 = vmax.xlane.f32.xlu0 %v552
    %v554 = vpop.xlane.xlu0 %553
    %vm555 = vcmp.ge.f32.partialorder %v551, %v554
    %v556 = vsel %vm555, %v440, 8.0
    %v557 = vsel %vm221, %v556, inf
    %558 = vmin.xlane.f32.xlu0 %v557
    %v559 = vpop.xlane.xlu0 %558
    %v560 = vcvt.f32.s32.to.zero.pseudo %v559
    %v561 = vsel %vm545, 4294967295, %v560
    %v562 = vstv %s520
    %s563 = scalar_select %p518, 1, 0
    %v564 = vstv %s563
    %vm565 = vcmp.eq.s32.totalorder %v564, 1
    %v566 = vsel %vm565, %v562, %v561
    %vm567 = vcmp.eq.s32.totalorder %v397, 2
    %v568 = vsel %vm567, %v566, %v510
    %vm569 = vcmp.ne.s32.totalorder %v397, %v566
    %v570 = vsel %vm569, 1, 0
    %v571 = vcvt.s32.f32 %v570
    %v572 = vmul.f32 %v514, %v571
    %s573 = sld [smem:[#allocation5 + $0x3]]
    %s574 = sadd.s32 %s573, 4
    %s575 = sld [smem:[#allocation5 + %s574]]
    %p576 = scmp.ne.s32.totalorder %s575, 0
    %s577 = sadd.s32 %s573, 8
    %s578 = sld [smem:[#allocation5 + %s577]]
    %v579 = vstv %s573
    %vm580 = vcmp.eq.s32.totalorder %v399, %v579
    %v581 = vsel %vm580, 1, 0
    %v582 = vcvt.s32.f32 %v581
    %v583 = vmul.f32 %v393, %v582
    %v584 = vsel %vm382, %v583, 0.0
    %v585 = vrot.slane %v584, 4
    %v586 = vadd.f32 %v584, %v585
    %v587 = vrot.slane %v586, 2
    %v588 = vadd.f32 %v586, %v587
    %v589 = vrot.slane %v588, 1
    %v590 = vadd.f32 %v588, %v589
    %v591 = vmul.f32 %v395, %v582
    %v592 = vsel %vm382, %v591, 0.0
    %v593 = vrot.slane %v592, 4
    %v594 = vadd.f32 %v592, %v593
    %v595 = vrot.slane %v594, 2
    %v596 = vadd.f32 %v594, %v595
    %v597 = vrot.slane %v596, 1
    %v598 = vadd.f32 %v596, %v597
    %v599 = vmul.f32 %v590, %v572
    %v600 = vsel %vm221, %v599, 0.0
    %601 = vadd.xlane.f32.xlu0 %v600
    %v602 = vpop.xlane.xlu0 %601
    %vm603 = vcmp.le.f32.partialorder %v602, 0.0
    %vm604 = vcmp.gt.f32.partialorder %v599, 0.0
    %v605 = vmax.f32 %v599, 1e-30
    %v606 = vlog2.pop %v605
    %v607 = vmul.f32 %v606, 0.6931472
    %v608 = vadd.f32 %v607, %v598
    %v609 = vsel %vm604, %v608, -1e+30
    %v610 = vsel %vm221, %v609, -inf
    %611 = vmax.xlane.f32.xlu0 %v610
    %v612 = vpop.xlane.xlu0 %611
    %vm613 = vcmp.ge.f32.partialorder %v609, %v612
    %v614 = vsel %vm613, %v440, 8.0
    %v615 = vsel %vm221, %v614, inf
    %616 = vmin.xlane.f32.xlu0 %v615
    %v617 = vpop.xlane.xlu0 %616
    %v618 = vcvt.f32.s32.to.zero.pseudo %v617
    %v619 = vsel %vm603, 4294967295, %v618
    %v620 = vstv %s578
    %s621 = scalar_select %p576, 1, 0
    %v622 = vstv %s621
    %vm623 = vcmp.eq.s32.totalorder %v622, 1
    %v624 = vsel %vm623, %v620, %v619
    %vm625 = vcmp.eq.s32.totalorder %v397, 3
    %v626 = vsel %vm625, %v624, %v568
    %vm627 = vcmask 24576
    %628 = vst.msk [vmem:[#allocation8] sm:$0x1] %vm627, %v626
    // Predicated region
    $region34: #{_policy_and_actions.1} parent=1 // pred_check
      _
    $region35: #{_policy_and_actions.1} parent=1 // pred_check_branch
      %630 = sbr.rel (0) target = $region37
    $region36: #{_policy_and_actions.1} parent=1 // pred_region
      %632 = vsyncadd [#allocation3], 0
      %s634 = sshll.u32 [#allocation7], 4
      %s635 = int_to_ptr.vmem [resolvable:$true] %s634
      %s636 = sshll.u32 %s6, 4
      %s637 = int_to_ptr.hbm [resolvable:$true] %s636
      %639 = dma.vmem_to_hbm [thread:$0]  %s635, 64, %s637, [#allocation3]
    $region37: #{_policy_and_actions.1} parent=1 // pred_fallthru
      _
    // Predicated region
    $region38: #{_policy_and_actions.1} parent=1 // pred_check
      _
    $region39: #{_policy_and_actions.1} parent=1 // pred_check_branch
      %641 = sbr.rel (0) target = $region41
    $region40: #{_policy_and_actions.1} parent=1 // pred_region
      %643 = vsyncadd [#allocation9], 0
      %s645 = sshll.u32 [#allocation8], 4
      %s646 = int_to_ptr.vmem [resolvable:$true] %s645
      %s647 = sshll.u32 %s7, 4
      %s648 = int_to_ptr.hbm [resolvable:$true] %s647
      %650 = dma.vmem_to_hbm [thread:$0]  %s646, 16, %s648, [#allocation9]
    $region41: #{_policy_and_actions.1} parent=1 // pred_fallthru
      _
    // Predicated region
    $region42: #{_policy_and_actions.1} parent=1 // pred_check
      _
    $region43: #{_policy_and_actions.1} parent=1 // pred_check_branch
      %652 = sbr.rel (0) target = $region45
    $region44: #{_policy_and_actions.1} parent=1 // pred_region
      %654 = dma.done [#allocation3], 64
    $region45: #{_policy_and_actions.1} parent=1 // pred_fallthru
      _
    // Predicated region
    $region46: #{_policy_and_actions.1} parent=1 // pred_check
      _
    $region47: #{_policy_and_actions.1} parent=1 // pred_check_branch
      %656 = sbr.rel (0) target = $region49
    $region48: #{_policy_and_actions.1} parent=1 // pred_region
      %658 = dma.done [#allocation9], 16
    $region49: #{_policy_and_actions.1} parent=1 // pred_fallthru
      _
    %659 = vsyncpa [#allocation3], 1
    %660 = vsyncpa [#allocation9], 1
    %661 = vsyncpa [#allocation4], 1
    %662 = vsyncpa [#allocation6], 1

</llo_original>
